<compile_context>
chip_gen: v7x
topology: tpu7x:2x2x1
jax: 0.10.0
libtpu: 0.0.40
codegen_flags: <defaults>
</compile_context>

<pallas_src>
import functools

import jax
import jax.numpy as jnp
import numpy as np
from jax.experimental import pallas as pl
from jax.experimental.pallas import tpu as pltpu

_TILE_CAP = 512   # 512-class tiles: ~85% of HBM roofline, fits every generation
_LANE = 128


def _round_up(x: int, m: int) -> int:
    return ((x + m - 1) // m) * m


# ----------------------------- kernels --------------------------------------

def _mlp_kernel_single_k(x_ref, w_ref, b_ref, o_ref):
    # Whole reduction dim in one block: no scratch, no branches, all-parallel grid.
    acc = jnp.dot(x_ref[...], w_ref[...], preferred_element_type=jnp.float32)
    acc = acc + b_ref[...]                                   # f32 bias add
    o_ref[...] = jnp.maximum(acc, 0.0).astype(o_ref.dtype)   # ReLU


def _mlp_kernel_ktiled(x_ref, w_ref, b_ref, o_ref, acc_ref):
    # x_ref: (tm, tk), w_ref: (tk, tn), b_ref: (1, tn) f32, acc_ref: (tm, tn) f32.
    k = pl.program_id(2)

    @pl.when(k == 0)
    def _():
        # Fold bias into the accumulator init (keeps the epilogue store short).
        acc_ref[...] = jnp.broadcast_to(b_ref[...], acc_ref.shape)

    acc_ref[...] += jnp.dot(x_ref[...], w_ref[...],
                            preferred_element_type=jnp.float32)

    @pl.when(k == pl.num_programs(2) - 1)
    def _():
        o_ref[...] = jnp.maximum(acc_ref[...], 0.0).astype(o_ref.dtype)


# --------------------------- parameter prep ---------------------------------

def prepare_mlp_params(w_t, b, compute_dtype=jnp.bfloat16):
    """Pad + cast weights ONCE (hoisted out of the per-call hot path).

    w_t: (d_in, d_out) = transpose of the nn.Linear weight; b: (d_out,).
    """
    d_in, d_out = w_t.shape
    tn = min(_TILE_CAP, _round_up(d_out, _LANE))
    tk = min(_TILE_CAP, _round_up(d_in, _LANE))
    K = _round_up(d_in, tk)
    N = _round_up(d_out, tn)
    w_p = jnp.zeros((K, N), compute_dtype).at[:d_in, :d_out].set(
        w_t.astype(compute_dtype))
    b_p = jnp.zeros((1, N), jnp.float32).at[0, :d_out].set(b.astype(jnp.float32))
    return dict(w=w_p, b=b_p, d_in=d_in, d_out=d_out, tn=tn, tk=tk)


def init_mlp_params(key, d_in, d_out, constant=1.0, compute_dtype=jnp.bfloat16):
    """Matches mlp_layer._init_weights: uniform(-scale, scale) weight, zero bias."""
    scale = constant * float(np.sqrt(6.0 / (d_in + d_out)))
    w = jax.random.uniform(key, (d_out, d_in), jnp.float32, -scale, scale)
    b = jnp.zeros((d_out,), jnp.float32)
    return prepare_mlp_params(w.T, b, compute_dtype)


# ------------------------------ forward -------------------------------------

@functools.partial(jax.jit, static_argnames=("d_in", "d_out", "tn", "tk"))
def _mlp_forward(x, w_p, b_p, *, d_in, d_out, tn, tk):
    B = x.shape[0]
    out_dtype = x.dtype
    K, N = w_p.shape
    cdt = w_p.dtype
    itm = jnp.dtype(cdt).itemsize

    # bf16 packs 16 rows per sublane-tile; f32 packs 8.
    sublane = 16 if cdt == jnp.bfloat16 else 8
    tm = min(_TILE_CAP, _round_up(B, sublane))
    M = _round_up(B, tm)

    xd = x.astype(cdt)
    if (M, K) != (B, d_in):
        # Zero-padding is exact: zero K-columns contribute nothing, padded rows
        # are sliced off below.
        x_p = jnp.zeros((M, K), cdt).at[:B, :d_in].set(xd)
    else:
        x_p = xd

    mt, nt, kt = M // tm, N // tn, K // tk

    # VMEM budget: double-buffered inputs/output + f32 accumulator, 2x headroom,
    # capped at 48 MiB (safe on v7x's 64 MiB, explicit on v5e's 16 MiB default).
    est = (2 * (tm * tk + tk * tn) * itm
           + 2 * tm * tn * jnp.dtype(out_dtype).itemsize
           + tm * tn * 4 + 2 * tn * 4)
    vmem_limit = int(min(48 * 2**20, max(32 * 2**20, 2 * est)))

    cost = pl.CostEstimate(
        flops=2 * M * N * K,
        transcendentals=0,
        bytes_accessed=(M * K * itm + mt * K * N * itm + N * 4
                        + M * N * jnp.dtype(out_dtype).itemsize),
    )

    if kt == 1:
        grid = (mt, nt)
        kernel = _mlp_kernel_single_k
        in_specs = [
            pl.BlockSpec((tm, tk), lambda i, j: (i, 0)),   # activations
            pl.BlockSpec((tk, tn), lambda i, j: (0, j)),   # weights (pre-padded)
            pl.BlockSpec((1, tn), lambda i, j: (0, j)),    # bias
        ]
        out_specs = pl.BlockSpec((tm, tn), lambda i, j: (i, j))
        scratch = []
        semantics = ("parallel", "parallel")
    else:
        grid = (mt, nt, kt)
        kernel = _mlp_kernel_ktiled
        in_specs = [
            pl.BlockSpec((tm, tk), lambda i, j, k: (i, k)),
            pl.BlockSpec((tk, tn), lambda i, j, k: (k, j)),
            pl.BlockSpec((1, tn), lambda i, j, k: (0, j)),
        ]
        out_specs = pl.BlockSpec((tm, tn), lambda i, j, k: (i, j))
        scratch = [pltpu.VMEM((tm, tn), jnp.float32)]
        semantics = ("parallel", "parallel", "arbitrary")

    out = pl.pallas_call(
        kernel,
        out_shape=jax.ShapeDtypeStruct((M, N), out_dtype),
        grid_spec=pltpu.PrefetchScalarGridSpec(
            num_scalar_prefetch=0,
            grid=grid,
            in_specs=in_specs,
            out_specs=out_specs,
            scratch_shapes=scratch,
        ),
        compiler_params=pltpu.CompilerParams(
            dimension_semantics=semantics,
            vmem_limit_bytes=vmem_limit,
        ),
        cost_estimate=cost,
    )(x_p, w_p, b_p)

    return out[:B, :d_out]


def mlp_layer_forward(x, params):
    """x: (B, d_in) -> relu(x @ W.T + b): (B, d_out)."""
    return _mlp_forward(x, params["w"], params["b"],
                        d_in=params["d_in"], d_out=params["d_out"],
                        tn=params["tn"], tk=params["tk"])


# ------------------------------- test ---------------------------------------

if __name__ == "__main__":
    key = jax.random.PRNGKey(0)
    k_w1, k_x1, k_w2, k_x2 = jax.random.split(key, 4)

    # Case 1: small shapes, single-K-tile (all-parallel) path, f32 compute, strict.
    b1, din1, dout1 = 8, 32, 32
    p1 = init_mlp_params(k_w1, din1, dout1, compute_dtype=jnp.float32)
    x1 = jax.random.normal(k_x1, (b1, din1), jnp.float32)
    y1 = mlp_layer_forward(x1, p1)
    jax.block_until_ready(y1)
    w1 = np.asarray(p1["w"], np.float32)[:din1, :dout1]
    ref1 = np.maximum(np.asarray(x1) @ w1 + np.asarray(p1["b"])[0, :dout1], 0.0)
    assert y1.shape == (b1, dout1)
    np.testing.assert_allclose(np.asarray(y1), ref1, rtol=1e-5, atol=1e-5)

    # Case 2: K-tiled accumulator path (d_in > 512), f32 compute, strict.
    b2, din2, dout2 = 48, 640, 384
    p2 = init_mlp_params(k_w2, din2, dout2, compute_dtype=jnp.float32)
    x2 = jax.random.normal(k_x2, (b2, din2), jnp.float32)
    y2 = mlp_layer_forward(x2, p2)
    jax.block_until_ready(y2)
    w2 = np.asarray(p2["w"], np.float32)[:din2, :dout2]
    ref2 = np.maximum(np.asarray(x2) @ w2 + np.asarray(p2["b"])[0, :dout2], 0.0)
    assert y2.shape == (b2, dout2)
    np.testing.assert_allclose(np.asarray(y2), ref2, rtol=1e-4, atol=1e-4)

    # Case 3: same shapes, default bf16 operands (perf path), checked against a
    # bf16-cast reference (accumulation is f32 in both).
    p3 = init_mlp_params(k_w2, din2, dout2)  # default compute_dtype=bf16
    y3 = mlp_layer_forward(x2, p3)
    jax.block_until_ready(y3)
    x2_bf = np.asarray(x2.astype(jnp.bfloat16).astype(jnp.float32))
    w3 = np.asarray(p3["w"].astype(jnp.float32))[:din2, :dout2]
    ref3 = np.maximum(x2_bf @ w3 + np.asarray(p3["b"])[0, :dout2], 0.0)
    np.testing.assert_allclose(np.asarray(y3), ref3, rtol=2e-2, atol=2e-2)

    print("KERNEL_OK")
</pallas_src>

<mosaic_0001>
module attributes {stable_mosaic.version = 11 : i64} {
  func.func @_mlp_kernel_single_k(%arg0: i32, %arg1: i32, %arg2: memref<8x128xf32, #tpu.memory_space<vmem>>, %arg3: memref<128x128xf32, #tpu.memory_space<vmem>>, %arg4: memref<1x128xf32, #tpu.memory_space<vmem>>, %arg5: memref<8x128xf32, #tpu.memory_space<vmem>>) attributes {dimension_semantics = [#tpu.dimension_semantics<parallel>, #tpu.dimension_semantics<parallel>], iteration_bounds = array<i64: 1, 1>, scalar_prefetch = 0 : i64, scratch_operands = 0 : i64, tpu.core_type = #tpu.core_type<tc>, window_params = [{transform_indices = @transform_0, window_bounds = array<i64: 8, 128>}, {transform_indices = @transform_1, window_bounds = array<i64: 128, 128>}, {transform_indices = @transform_2, window_bounds = array<i64: 1, 128>}, {transform_indices = @transform_3, window_bounds = array<i64: 8, 128>}]} {
    %c0 = arith.constant 0 : index
    %c0_0 = arith.constant 0 : index
    %0 = vector.load %arg2[%c0, %c0_0] : memref<8x128xf32, #tpu.memory_space<vmem>>, vector<8x128xf32>
    %c0_1 = arith.constant 0 : index
    %c0_2 = arith.constant 0 : index
    %1 = vector.load %arg3[%c0_1, %c0_2] : memref<128x128xf32, #tpu.memory_space<vmem>>, vector<128x128xf32>
    %cst = arith.constant dense<0.000000e+00> : vector<8x128xf32>
    %2 = tpu.matmul %0, %1, %cst {dimension_numbers = #tpu.dot_dimension_numbers<[1], [0], [0], [1], [0, 0, 1, 1], [], []>} : vector<8x128xf32>, vector<128x128xf32>, vector<8x128xf32> -> vector<8x128xf32>
    %c0_3 = arith.constant 0 : index
    %c0_4 = arith.constant 0 : index
    %3 = vector.load %arg4[%c0_3, %c0_4] : memref<1x128xf32, #tpu.memory_space<vmem>>, vector<1x128xf32>
    %4 = vector.broadcast %3 : vector<1x128xf32> to vector<8x128xf32>
    %5 = arith.addf %2, %4 : vector<8x128xf32>
    %cst_5 = arith.constant 0.000000e+00 : f32
    %6 = vector.broadcast %cst_5 : f32 to vector<8x128xf32>
    %7 = arith.maximumf %5, %6 : vector<8x128xf32>
    %c0_6 = arith.constant 0 : index
    %c0_7 = arith.constant 0 : index
    %8 = vector.load %arg5[%c0_6, %c0_7] : memref<8x128xf32, #tpu.memory_space<vmem>>, vector<8x128xf32>
    tpu.vector_store %arg5[%c0_6, %c0_7], %7 {strides = array<i32>} : memref<8x128xf32, #tpu.memory_space<vmem>>, vector<8x128xf32>,
    return
  }
  func.func @transform_0(%arg0: i32, %arg1: i32) -> (i32, i32) {
    %c0_i32 = arith.constant 0 : i32
    %c0_i32_0 = arith.constant 0 : i32
    return %arg0, %c0_i32 : i32, i32
  }
  func.func @transform_1(%arg0: i32, %arg1: i32) -> (i32, i32) {
    %c0_i32 = arith.constant 0 : i32
    %c0_i32_0 = arith.constant 0 : i32
    return %c0_i32, %arg1 : i32, i32
  }
  func.func @transform_2(%arg0: i32, %arg1: i32) -> (i32, i32) {
    %c0_i32 = arith.constant 0 : i32
    %c0_i32_0 = arith.constant 0 : i32
    return %c0_i32, %arg1 : i32, i32
  }
  func.func @transform_3(%arg0: i32, %arg1: i32) -> (i32, i32) {
    %c0_i32 = arith.constant 0 : i32
    return %arg0, %arg1 : i32, i32
  }
}

</mosaic_0001>

<llo_original>
// kernel: _mlp_forward.1
$region0: #{_mlp_forward.1}
  #allocation0 [shape = 'u32[]', space=smem, size = 0x4, offset = 0x4, fixed_abs, tag = 'smem constant byte address 0x4 - core index']
  #allocation1 [shape = 'u32[144,128]{1,0:T(1,128)}', space=vmem, size = 0x12000, scoped, tag = 'internal scratch']
  %s0 = inlined_call_operand.vmem [shape: f32[8,128], index: 0, kind: input, shape index: {}]
  %s1 = inlined_call_operand.hbm [shape: f32[128,128], index: 1, kind: input, shape index: {}]
  %s2 = inlined_call_operand.vmem [shape: f32[1,128], index: 2, kind: input, shape index: {}]
  %s3 = inlined_call_operand.hbm [shape: f32[8,128], index: 3, kind: output, shape index: {}]
  %s4 = sld [smem:[#allocation0]]
  $region26: #{_mlp_forward.1} parent=0
    _
  %s6 = ssub.s32 1, %s4
  %s7 = scalar_select 0, %s6, %s4
  $region1: #{_mlp_forward.1} parent=0
    #allocation2 [shape = 'u8[65536]{0}', space=vmem, size = 0x10000, scoped, tag = 'input window, operand 1, single buffered']
    #allocation3 [shape = 's32[1]{0}', space=sflag, size = 0x4, scoped, tag = 'scoped memory for _mlp_forward.1']
    #allocation4 [shape = 's32[1]{0}', space=sflag, size = 0x4, scoped, tag = 'scoped memory for _mlp_forward.1']
    #allocation5 [shape = 'u8[4096]{0}', space=vmem, size = 0x1000, scoped, tag = 'output window, operand 0, single buffered']
    %8 = vsyncpa [#allocation3], 0
    %9 = vsyncpa [#allocation4], 0
    // Predicated region
    $region2: #{_mlp_forward.1} parent=1 // pred_check
      _
    $region3: #{_mlp_forward.1} parent=1 // pred_check_branch
      %11 = sbr.rel (0) target = $region5
    $region4: #{_mlp_forward.1} parent=1 // pred_region
      _
    $region5: #{_mlp_forward.1} parent=1 // pred_fallthru
      _
    // Predicated region
    $region6: #{_mlp_forward.1} parent=1 // pred_check
      _
    $region7: #{_mlp_forward.1} parent=1 // pred_check_branch
      %13 = sbr.rel (0) target = $region9
    $region8: #{_mlp_forward.1} parent=1 // pred_region
      %s15 = ssub.s32 2048, 2048
      %16 = vsyncadd [#allocation3], %s15
      %s17 = sshll.u32 [#allocation2], 4
      %s18 = int_to_ptr.vmem [resolvable:$true] %s17
      %23 = dma.hbm_to_vmem [thread:$0]  %s1, 2048, %s18, [#allocation3], 128, 128, 8
    $region9: #{_mlp_forward.1} parent=1 // pred_fallthru
      _
    // Predicated region
    $region10: #{_mlp_forward.1} parent=1 // pred_check
      _
    $region11: #{_mlp_forward.1} parent=1 // pred_check_branch
      %25 = sbr.rel (0) target = $region13
    $region12: #{_mlp_forward.1} parent=1 // pred_region
      _
    $region13: #{_mlp_forward.1} parent=1 // pred_fallthru
      _
    // Predicated region
    $region14: #{_mlp_forward.1} parent=1 // pred_check
      _
    $region15: #{_mlp_forward.1} parent=1 // pred_check_branch
      %27 = sbr.rel (0) target = $region17
    $region16: #{_mlp_forward.1} parent=1 // pred_region
      %28 = dma.done [#allocation3], 2048
    $region17: #{_mlp_forward.1} parent=1 // pred_fallthru
      _
    %v29 = vld [vmem:[%s0] sm:$0xff]
    %v30 = vld [vmem:[#allocation2] sm:$0xff]
    %v31 = vld [vmem:[#allocation2 + $0x8] sm:$0xff]
    %v32 = vld [vmem:[#allocation2 + $0x10] sm:$0xff]
    %v33 = vld [vmem:[#allocation2 + $0x18] sm:$0xff]
    %v34 = vld [vmem:[#allocation2 + $0x20] sm:$0xff]
    %v35 = vld [vmem:[#allocation2 + $0x28] sm:$0xff]
    %v36 = vld [vmem:[#allocation2 + $0x30] sm:$0xff]
    %v37 = vld [vmem:[#allocation2 + $0x38] sm:$0xff]
    %v38 = vld [vmem:[#allocation2 + $0x40] sm:$0xff]
    %v39 = vld [vmem:[#allocation2 + $0x48] sm:$0xff]
    %v40 = vld [vmem:[#allocation2 + $0x50] sm:$0xff]
    %v41 = vld [vmem:[#allocation2 + $0x58] sm:$0xff]
    %v42 = vld [vmem:[#allocation2 + $0x60] sm:$0xff]
    %v43 = vld [vmem:[#allocation2 + $0x68] sm:$0xff]
    %v44 = vld [vmem:[#allocation2 + $0x70] sm:$0xff]
    %v45 = vld [vmem:[#allocation2 + $0x78] sm:$0xff]
    %v46 = vld [vmem:[%s2] sm:$0x1]
    %v48 = vlaneseq
    %v49 = vshrl.u32 %v48, 7
    %v50 = vsub.s32 0, %v49
    %v51 = vrot.slane %v46, %v50
    %53 = vmatprep.subr.mxu0 0.0
    %54 = vmatpush1.msra.mxu0 %v30
    %55 = vmatprep.subr.mxu0 0.0
    %56 = vmatpush1.msra.mxu0 %v31
    %57 = vmatprep.subr.mxu0 0.0
    %58 = vmatpush1.msra.mxu0 %v32
    %59 = vmatprep.subr.mxu0 0.0
    %60 = vmatpush1.msra.mxu0 %v33
    %61 = vmatprep.subr.mxu0 0.0
    %62 = vmatpush1.msra.mxu0 %v34
    %63 = vmatprep.subr.mxu0 0.0
    %64 = vmatpush1.msra.mxu0 %v35
    %65 = vmatprep.subr.mxu0 0.0
    %66 = vmatpush1.msra.mxu0 %v36
    %67 = vmatprep.subr.mxu0 0.0
    %68 = vmatpush1.msra.mxu0 %v37
    %69 = vmatprep.subr.mxu0 0.0
    %70 = vmatpush1.msra.mxu0 %v38
    %71 = vmatprep.subr.mxu0 0.0
    %72 = vmatpush1.msra.mxu0 %v39
    %73 = vmatprep.subr.mxu0 0.0
    %74 = vmatpush1.msra.mxu0 %v40
    %75 = vmatprep.subr.mxu0 0.0
    %76 = vmatpush1.msra.mxu0 %v41
    %77 = vmatprep.subr.mxu0 0.0
    %78 = vmatpush1.msra.mxu0 %v42
    %79 = vmatprep.subr.mxu0 0.0
    %80 = vmatpush1.msra.mxu0 %v43
    %81 = vmatprep.subr.mxu0 0.0
    %82 = vmatpush1.msra.mxu0 %v44
    %83 = vmatprep.subr.mxu0 0.0
    %84 = vmatpush1.msra.mxu0 %v45
    %85 = vmatprep.subr.mxu0 0.0
    %86 = vmatpush1.msra.mxu0 0.0
    %87 = vmatprep.subr.mxu0 0.0
    %88 = vmatpush1.msra.mxu0 0.0
    %89 = vmatprep.subr.mxu0 0.0
    %90 = vmatpush1.msra.mxu0 0.0
    %91 = vmatprep.subr.mxu0 0.0
    %92 = vmatpush1.msra.mxu0 0.0
    %93 = vmatprep.subr.mxu0 0.0
    %94 = vmatpush1.msra.mxu0 0.0
    %95 = vmatprep.subr.mxu0 0.0
    %96 = vmatpush1.msra.mxu0 0.0
    %97 = vmatprep.subr.mxu0 0.0
    %98 = vmatpush1.msra.mxu0 0.0
    %99 = vmatprep.subr.mxu0 0.0
    %100 = vmatpush1.msra.mxu0 0.0
    %101 = vmatprep.subr.mxu0 0.0
    %102 = vmatpush1.msra.mxu0 0.0
    %103 = vmatprep.subr.mxu0 0.0
    %104 = vmatpush1.msra.mxu0 0.0
    %105 = vmatprep.subr.mxu0 0.0
    %106 = vmatpush1.msra.mxu0 0.0
    %107 = vmatprep.subr.mxu0 0.0
    %108 = vmatpush1.msra.mxu0 0.0
    %109 = vmatprep.subr.mxu0 0.0
    %110 = vmatpush1.msra.mxu0 0.0
    %111 = vmatprep.subr.mxu0 0.0
    %112 = vmatpush1.msra.mxu0 0.0
    %113 = vmatprep.subr.mxu0 0.0
    %114 = vmatpush1.msra.mxu0 0.0
    %115 = vmatprep.subr.mxu0 0.0
    %116 = vmatpush1.msra.mxu0 0.0
    %117 = vmatprep.mubr.f32.mxu0 0.0
    %118 = vmatmul.mubr.f32.gmra.mrb[0].mxu0 %v29
    %v119 = vpop.f32.mrb[0].mxu0
    %v120 = vadd.f32 %v51, %v119
    %v121 = vpop.f32.mrb[0].mxu0
    %122 = vdwg.mxu0
    %v123 = vmax.f32 %v120, 0.0
    %124 = vst [vmem:[#allocation5] sm:$0xff] %v123
    // Predicated region
    $region18: #{_mlp_forward.1} parent=1 // pred_check
      _
    $region19: #{_mlp_forward.1} parent=1 // pred_check_branch
      %126 = sbr.rel (0) target = $region21
    $region20: #{_mlp_forward.1} parent=1 // pred_region
      %s128 = ssub.s32 128, 128
      %129 = vsyncadd [#allocation4], %s128
      %s131 = sshll.u32 [#allocation5], 4
      %s132 = int_to_ptr.vmem [resolvable:$true] %s131
      %134 = dma.vmem_to_hbm [thread:$0]  %s132, 128, %s3, [#allocation4]
    $region21: #{_mlp_forward.1} parent=1 // pred_fallthru
      _
    // Predicated region
    $region22: #{_mlp_forward.1} parent=1 // pred_check
      _
    $region23: #{_mlp_forward.1} parent=1 // pred_check_branch
      %136 = sbr.rel (0) target = $region25
    $region24: #{_mlp_forward.1} parent=1 // pred_region
      %137 = dma.done [#allocation4], 128
    $region25: #{_mlp_forward.1} parent=1 // pred_fallthru
      _
    %138 = vsyncpa [#allocation3], 1
    %139 = vsyncpa [#allocation4], 1

</llo_original>
